<compile_context>
chip_gen: v7x
topology: tpu7x:2x2x1
jax: 0.10.0
libtpu: 0.0.40
codegen_flags: <defaults>
</compile_context>

<pallas_src>
import jax
import jax.numpy as jnp
from jax.experimental import pallas as pl
from jax.experimental.pallas import tpu as pltpu

_MIB = 1024 * 1024


def _round_up(x, m):
    return ((x + m - 1) // m) * m


def _vmem_budget_bytes():
    """Generation-aware usable VMEM budget (~85% of physical capacity)."""
    cap = 64 * _MIB  # conservative fallback (v7x per-TC VMEM)
    try:
        info = pltpu.get_tpu_info()
        cap = int(getattr(info, "vmem_capacity_bytes", cap))
    except Exception:
        pass
    return int(cap * 0.85)


# ---------------------------------------------------------------------------
# Kernels
# ---------------------------------------------------------------------------
def _ffn_resident_kernel(x_ref, w1_ref, b1_ref, w2_ref, b2_ref, o_ref):
    """Both matmuls fused; full w1/w2 resident in VMEM."""
    xb = x_ref[...].astype(w1_ref.dtype)       # cast on the VPU, hides under the MXU
    h = jnp.dot(xb, w1_ref[...], preferred_element_type=jnp.float32)
    h = jnp.maximum(h + b1_ref[...], 0.0)      # bias + ReLU in f32
    # TODO(synk): dropout is identity (eval mode); training-mode dropout would need
    #             pltpu.prng_seed / pltpu.prng_random_bits masking here.
    y = jnp.dot(h.astype(w2_ref.dtype), w2_ref[...], preferred_element_type=jnp.float32)
    o_ref[...] = (y + b2_ref[...]).astype(o_ref.dtype)


def _ffn_stream_kernel(x_ref, w1_ref, b1_ref, w2_ref, b2_ref, o_ref, acc_ref):
    """Hidden-dim streaming: w1/w2 blocked along hidden, f32 accumulator scratch."""
    k = pl.program_id(1)

    @pl.when(k == 0)
    def _():
        acc_ref[...] = jnp.zeros_like(acc_ref)

    xb = x_ref[...].astype(w1_ref.dtype)
    h = jnp.dot(xb, w1_ref[...], preferred_element_type=jnp.float32)
    h = jnp.maximum(h + b1_ref[...], 0.0)
    acc_ref[...] += jnp.dot(h.astype(w2_ref.dtype), w2_ref[...],
                            preferred_element_type=jnp.float32)

    @pl.when(k == pl.num_programs(1) - 1)
    def _():
        o_ref[...] = (acc_ref[...] + b2_ref[...]).astype(o_ref.dtype)


# ---------------------------------------------------------------------------
# VMEM planning
# ---------------------------------------------------------------------------
def _resident_vmem_need(tm, idim_p, hidden_p, x_sz, out_sz, w_sz):
    return (
        2 * idim_p * hidden_p * w_sz          # w1 + w2, single-buffered resident
        + (hidden_p + idim_p) * 4             # f32 biases
        + 2 * tm * idim_p * x_sz              # x tile, double-buffered (f32 in)
        + 2 * tm * idim_p * out_sz            # out tile, double-buffered
        + tm * idim_p * w_sz                  # bf16 cast copy of x
        + tm * hidden_p * 4                   # h in f32
        + tm * hidden_p * w_sz                # bf16 cast copy of h
    )


def _stream_vmem_need(tm, th, idim_p, x_sz, out_sz, w_sz):
    return (
        2 * (idim_p * th + th * idim_p) * w_sz    # w1/w2 blocks, double-buffered
        + 2 * th * 4 + idim_p * 4                 # b1 blocks (dbl) + b2 resident
        + 2 * tm * idim_p * x_sz                  # x tile
        + 2 * tm * idim_p * out_sz                # out tile
        + tm * idim_p * 4                         # f32 accumulator scratch
        + tm * idim_p * w_sz                      # bf16 cast copy of x
        + tm * th * 4 + tm * th * w_sz            # h f32 + bf16 cast copy of h
    )


# ---------------------------------------------------------------------------
# One-time parameter preparation (call once at init, NOT per forward call)
# ---------------------------------------------------------------------------
def prepare_ffn_params(w1, b1, w2, b2, *, mxu_dtype=jnp.bfloat16, align=256):
    """Pad feature dims to multiples of `align` (256 for the v6e/v7x 256x256 MXU)
    and cast weights to the MXU dtype once, so per-call HBM traffic is just x/out."""
    idim, hidden = w1.shape
    idim_p = _round_up(idim, align)
    hidden_p = _round_up(hidden, align)
    w1_p = jnp.pad(w1, ((0, idim_p - idim), (0, hidden_p - hidden))).astype(mxu_dtype)
    w2_p = jnp.pad(w2, ((0, hidden_p - hidden), (0, idim_p - idim))).astype(mxu_dtype)
    b1_p = jnp.pad(b1, (0, hidden_p - hidden)).astype(jnp.float32).reshape(1, hidden_p)
    b2_p = jnp.pad(b2, (0, idim_p - idim)).astype(jnp.float32).reshape(1, idim_p)
    return {"w1": w1_p, "b1": b1_p, "w2": w2_p, "b2": b2_p,
            "idim": idim, "hidden": hidden}


# ---------------------------------------------------------------------------
# Forward
# ---------------------------------------------------------------------------
def positionwise_feed_forward(xs, params, *, tm=None, out_dtype=None, force_path=None):
    """Pallas equivalent of PositionwiseFeedForward.forward.

    xs: (B, T, idim); params from prepare_ffn_params. Returns (out, xs).
    """
    w1_p, b1_p, w2_p, b2_p = params["w1"], params["b1"], params["w2"], params["b2"]
    idim = params["idim"]
    idim_p, hidden_p = w1_p.shape
    B, T, _ = xs.shape
    M = B * T
    out_dtype = out_dtype or xs.dtype

    x_sz = jnp.dtype(xs.dtype).itemsize
    out_sz = jnp.dtype(out_dtype).itemsize
    w_sz = jnp.dtype(w1_p.dtype).itemsize

    budget = _vmem_budget_bytes()
    if tm is None:
        # v5e/v6e (~109 MiB budget): bigger row tiles; v7x (~54 MiB): 256.
        tm = 512 if budget >= 96 * _MIB else 256
    # Round small M to the bf16 packed sublane tile (16), not 8.
    tm_eff = min(tm, _round_up(M, 16))

    resident_need = _resident_vmem_need(tm_eff, idim_p, hidden_p, x_sz, out_sz, w_sz)
    use_resident = int(resident_need * 1.15) <= budget
    if force_path == "resident":
        use_resident = True
    elif force_path == "stream":
        use_resident = False

    th = hidden_p
    if not use_resident:
        # Pick the largest hidden block (multiple of 256 dividing hidden_p) that fits;
        # shrink the row tile if even th=256 does not fit.
        found = False
        while not found:
            for cand in (8192, 4096, 2048, 1024, 512, 256):
                if hidden_p % cand == 0 and int(
                        _stream_vmem_need(tm_eff, cand, idim_p, x_sz, out_sz, w_sz) * 1.15) <= budget:
                    th, found = cand, True
                    break
            if not found:
                if tm_eff <= 16:
                    th, found = 256, True       # best effort
                else:
                    tm_eff = max(tm_eff // 2, 16)
        vmem_need = _stream_vmem_need(tm_eff, th, idim_p, x_sz, out_sz, w_sz)
    else:
        vmem_need = resident_need

    Mp = _round_up(M, tm_eff)

    # x stays in its original dtype (f32); the kernel casts to the MXU dtype on-chip.
    x2d = xs.reshape(M, idim)
    if Mp != M or idim_p != idim:
        x2d = jnp.pad(x2d, ((0, Mp - M), (0, idim_p - idim)))

    # Advisory cost estimate for XLA's scheduler.
    flops = 4 * Mp * idim_p * hidden_p
    bytes_accessed = (
        x2d.size * x2d.dtype.itemsize
        + w1_p.size * w_sz + w2_p.size * w_sz
        + b1_p.size * 4 + b2_p.size * 4
        + Mp * idim_p * out_sz
    )
    cost = pl.CostEstimate(flops=flops, transcendentals=0, bytes_accessed=bytes_accessed)

    vmem_limit = int(min(max(int(vmem_need * 1.2), 32 * _MIB), budget))

    if use_resident:
        grid = (Mp // tm_eff,)
        in_specs = [
            pl.BlockSpec((tm_eff, idim_p), lambda i: (i, 0)),                       # x row tile
            pl.BlockSpec((idim_p, hidden_p), lambda i: (0, 0),
                         pipeline_mode=pl.Buffered(1)),                             # w1 resident
            pl.BlockSpec((1, hidden_p), lambda i: (0, 0),
                         pipeline_mode=pl.Buffered(1)),                             # b1 resident
            pl.BlockSpec((hidden_p, idim_p), lambda i: (0, 0),
                         pipeline_mode=pl.Buffered(1)),                             # w2 resident
            pl.BlockSpec((1, idim_p), lambda i: (0, 0),
                         pipeline_mode=pl.Buffered(1)),                             # b2 resident
        ]
        out_specs = pl.BlockSpec((tm_eff, idim_p), lambda i: (i, 0))
        scratch_shapes = []
        kernel = _ffn_resident_kernel
        dims = ("parallel",)
    else:
        grid = (Mp // tm_eff, hidden_p // th)
        in_specs = [
            pl.BlockSpec((tm_eff, idim_p), lambda i, k: (i, 0)),                    # x row tile
            pl.BlockSpec((idim_p, th), lambda i, k: (0, k)),                        # w1 block
            pl.BlockSpec((1, th), lambda i, k: (0, k)),                             # b1 block
            pl.BlockSpec((th, idim_p), lambda i, k: (k, 0)),                        # w2 block
            pl.BlockSpec((1, idim_p), lambda i, k: (0, 0),
                         pipeline_mode=pl.Buffered(1)),                             # b2 resident
        ]
        out_specs = pl.BlockSpec((tm_eff, idim_p), lambda i, k: (i, 0))
        scratch_shapes = [pltpu.VMEM((tm_eff, idim_p), jnp.float32)]                # accumulator
        kernel = _ffn_stream_kernel
        dims = ("parallel", "arbitrary")

    # TODO(synk): for decode-sized M on v7x (2 TCs), a second parallel axis over idim
    #             would keep both TensorCores busy; single row axis used here.
    out2d = pl.pallas_call(
        kernel,
        out_shape=jax.ShapeDtypeStruct((Mp, idim_p), out_dtype),
        grid_spec=pltpu.PrefetchScalarGridSpec(
            num_scalar_prefetch=0,
            grid=grid,
            in_specs=in_specs,
            out_specs=out_specs,
            scratch_shapes=scratch_shapes,
        ),
        compiler_params=pltpu.CompilerParams(
            dimension_semantics=dims,
            vmem_limit_bytes=vmem_limit,
        ),
        cost_estimate=cost,
    )(x2d, w1_p, b1_p, w2_p, b2_p)

    out = out2d[:M, :idim].reshape(B, T, idim)
    return out, xs


if __name__ == "__main__":
    # Small shapes consistent with the module: batch=2, seq=8, idim=32, hidden=64.
    B, T, idim, hidden = 2, 8, 32, 64
    key = jax.random.PRNGKey(0)
    kx, kw1, kb1, kw2, kb2 = jax.random.split(key, 5)

    xs = jax.random.normal(kx, (B, T, idim), dtype=jnp.float32)
    w1 = jax.random.uniform(kw1, (idim, hidden), dtype=jnp.float32,
                            minval=-1.0, maxval=1.0) / jnp.sqrt(idim)
    b1 = jax.random.uniform(kb1, (hidden,), dtype=jnp.float32,
                            minval=-1.0, maxval=1.0) / jnp.sqrt(idim)
    w2 = jax.random.uniform(kw2, (hidden, idim), dtype=jnp.float32,
                            minval=-1.0, maxval=1.0) / jnp.sqrt(hidden)
    b2 = jax.random.uniform(kb2, (idim,), dtype=jnp.float32,
                            minval=-1.0, maxval=1.0) / jnp.sqrt(hidden)

    # One-time parameter preparation (pad + cast hoisted out of the per-call path).
    params = prepare_ffn_params(w1, b1, w2, b2)

    # Reference in plain JAX with the same bf16 MXU operands / f32 accumulation.
    xb = xs.reshape(-1, idim).astype(jnp.bfloat16)
    h_ref = jnp.maximum(
        jnp.dot(xb, w1.astype(jnp.bfloat16), preferred_element_type=jnp.float32) + b1, 0.0)
    ref = jnp.dot(h_ref.astype(jnp.bfloat16), w2.astype(jnp.bfloat16),
                  preferred_element_type=jnp.float32) + b2
    ref = ref.reshape(B, T, idim).astype(xs.dtype)

    # Exercise both paths (resident weights, and hidden-streaming fallback).
    for path in ("resident", "stream"):
        out, xs_back = positionwise_feed_forward(xs, params, force_path=path)
        jax.block_until_ready(out)
        jax.block_until_ready(xs_back)
        assert out.shape == xs.shape and xs_back.shape == xs.shape
        assert jnp.allclose(out, ref, atol=1e-2, rtol=1e-2), f"mismatch on {path} path"
        assert jnp.array_equal(xs_back, xs)

    print("KERNEL_OK")
</pallas_src>

<mosaic_0001>
module attributes {stable_mosaic.version = 11 : i64} {
  func.func @_ffn_resident_kernel(%arg0: i32, %arg1: memref<16x256xf32, #tpu.memory_space<vmem>>, %arg2: memref<256x256xbf16, #tpu.memory_space<vmem>>, %arg3: memref<1x256xf32, #tpu.memory_space<vmem>>, %arg4: memref<256x256xbf16, #tpu.memory_space<vmem>>, %arg5: memref<1x256xf32, #tpu.memory_space<vmem>>, %arg6: memref<16x256xf32, #tpu.memory_space<vmem>>) attributes {dimension_semantics = [#tpu.dimension_semantics<parallel>], iteration_bounds = array<i64: 1>, scalar_prefetch = 0 : i64, scratch_operands = 0 : i64, tpu.core_type = #tpu.core_type<tc>, window_params = [{transform_indices = @transform_0, window_bounds = array<i64: 16, 256>}, {pipeline_mode = #tpu.pipeline_mode<synchronous>, transform_indices = @transform_1, window_bounds = array<i64: 256, 256>}, {pipeline_mode = #tpu.pipeline_mode<synchronous>, transform_indices = @transform_2, window_bounds = array<i64: 1, 256>}, {pipeline_mode = #tpu.pipeline_mode<synchronous>, transform_indices = @transform_3, window_bounds = array<i64: 256, 256>}, {pipeline_mode = #tpu.pipeline_mode<synchronous>, transform_indices = @transform_4, window_bounds = array<i64: 1, 256>}, {transform_indices = @transform_5, window_bounds = array<i64: 16, 256>}]} {
    %c0 = arith.constant 0 : index
    %c0_0 = arith.constant 0 : index
    %0 = vector.load %arg1[%c0, %c0_0] : memref<16x256xf32, #tpu.memory_space<vmem>>, vector<16x256xf32>
    %1 = arith.truncf %0 : vector<16x256xf32> to vector<16x256xbf16>
    %c0_1 = arith.constant 0 : index
    %c0_2 = arith.constant 0 : index
    %2 = vector.load %arg2[%c0_1, %c0_2] : memref<256x256xbf16, #tpu.memory_space<vmem>>, vector<256x256xbf16>
    %cst = arith.constant dense<0.000000e+00> : vector<16x256xf32>
    %3 = tpu.matmul %1, %2, %cst {dimension_numbers = #tpu.dot_dimension_numbers<[1], [0], [0], [1], [0, 0, 1, 1], [], []>} : vector<16x256xbf16>, vector<256x256xbf16>, vector<16x256xf32> -> vector<16x256xf32>
    %c0_3 = arith.constant 0 : index
    %c0_4 = arith.constant 0 : index
    %4 = vector.load %arg3[%c0_3, %c0_4] : memref<1x256xf32, #tpu.memory_space<vmem>>, vector<1x256xf32>
    %5 = vector.broadcast %4 : vector<1x256xf32> to vector<16x256xf32>
    %6 = arith.addf %3, %5 : vector<16x256xf32>
    %cst_5 = arith.constant 0.000000e+00 : f32
    %7 = vector.broadcast %cst_5 : f32 to vector<16x256xf32>
    %8 = arith.maximumf %6, %7 : vector<16x256xf32>
    %9 = arith.truncf %8 : vector<16x256xf32> to vector<16x256xbf16>
    %c0_6 = arith.constant 0 : index
    %c0_7 = arith.constant 0 : index
    %10 = vector.load %arg4[%c0_6, %c0_7] : memref<256x256xbf16, #tpu.memory_space<vmem>>, vector<256x256xbf16>
    %cst_8 = arith.constant dense<0.000000e+00> : vector<16x256xf32>
    %11 = tpu.matmul %9, %10, %cst_8 {dimension_numbers = #tpu.dot_dimension_numbers<[1], [0], [0], [1], [0, 0, 1, 1], [], []>} : vector<16x256xbf16>, vector<256x256xbf16>, vector<16x256xf32> -> vector<16x256xf32>
    %c0_9 = arith.constant 0 : index
    %c0_10 = arith.constant 0 : index
    %12 = vector.load %arg5[%c0_9, %c0_10] : memref<1x256xf32, #tpu.memory_space<vmem>>, vector<1x256xf32>
    %13 = vector.broadcast %12 : vector<1x256xf32> to vector<16x256xf32>
    %14 = arith.addf %11, %13 : vector<16x256xf32>
    %c0_11 = arith.constant 0 : index
    %c0_12 = arith.constant 0 : index
    %15 = vector.load %arg6[%c0_11, %c0_12] : memref<16x256xf32, #tpu.memory_space<vmem>>, vector<16x256xf32>
    tpu.vector_store %arg6[%c0_11, %c0_12], %14 {strides = array<i32>} : memref<16x256xf32, #tpu.memory_space<vmem>>, vector<16x256xf32>,
    return
  }
  func.func @transform_0(%arg0: i32) -> (i32, i32) {
    %c0_i32 = arith.constant 0 : i32
    %c0_i32_0 = arith.constant 0 : i32
    return %arg0, %c0_i32 : i32, i32
  }
  func.func @transform_1(%arg0: i32) -> (i32, i32) {
    %c0_i32 = arith.constant 0 : i32
    %c0_i32_0 = arith.constant 0 : i32
    %c0_i32_1 = arith.constant 0 : i32
    return %c0_i32, %c0_i32_0 : i32, i32
  }
  func.func @transform_2(%arg0: i32) -> (i32, i32) {
    %c0_i32 = arith.constant 0 : i32
    %c0_i32_0 = arith.constant 0 : i32
    %c0_i32_1 = arith.constant 0 : i32
    return %c0_i32, %c0_i32_0 : i32, i32
  }
  func.func @transform_3(%arg0: i32) -> (i32, i32) {
    %c0_i32 = arith.constant 0 : i32
    %c0_i32_0 = arith.constant 0 : i32
    %c0_i32_1 = arith.constant 0 : i32
    return %c0_i32, %c0_i32_0 : i32, i32
  }
  func.func @transform_4(%arg0: i32) -> (i32, i32) {
    %c0_i32 = arith.constant 0 : i32
    %c0_i32_0 = arith.constant 0 : i32
    %c0_i32_1 = arith.constant 0 : i32
    return %c0_i32, %c0_i32_0 : i32, i32
  }
  func.func @transform_5(%arg0: i32) -> (i32, i32) {
    %c0_i32 = arith.constant 0 : i32
    %c0_i32_0 = arith.constant 0 : i32
    return %arg0, %c0_i32 : i32, i32
  }
}

</mosaic_0001>

<llo_original>
// kernel: tpu_custom_call.1
$region0: #{tpu_custom_call.1}
  #allocation0 [shape = 'u32[]', space=smem, size = 0x4, offset = 0x4, fixed_abs, tag = 'smem constant byte address 0x4 - core index']
  #allocation1 [shape = 'u32[144,128]{1,0:T(1,128)}', space=vmem, size = 0x12000, scoped, tag = 'internal scratch']
  %s0 = inlined_call_operand.hbm [shape: f32[16,256], index: 0, kind: input, shape index: {}]
  %s1 = inlined_call_operand.hbm [shape: bf16[256,256], index: 1, kind: input, shape index: {}]
  %s2 = inlined_call_operand.vmem [shape: f32[1,256], index: 2, kind: input, shape index: {}]
  %s3 = inlined_call_operand.hbm [shape: bf16[256,256], index: 3, kind: input, shape index: {}]
  %s4 = inlined_call_operand.vmem [shape: f32[1,256], index: 4, kind: input, shape index: {}]
  %s5 = inlined_call_operand.hbm [shape: f32[16,256], index: 5, kind: output, shape index: {}]
  %s6 = sld [smem:[#allocation0]]
  $region42: #{tpu_custom_call.1} parent=0
    _
  %s8 = ssub.s32 1, %s6
  %s9 = scalar_select 0, %s8, %s6
  $region1: #{tpu_custom_call.1} parent=0
    #allocation2 [shape = 'u8[16384]{0}', space=vmem, size = 0x4000, scoped, tag = 'input window, operand 0, single buffered']
    #allocation3 [shape = 's32[1]{0}', space=sflag, size = 0x4, scoped, tag = 'scoped memory for tpu_custom_call.1']
    #allocation4 [shape = 's32[1]{0}', space=sflag, size = 0x4, scoped, tag = 'scoped memory for tpu_custom_call.1']
    #allocation5 [shape = 'u8[131072]{0}', space=vmem, size = 0x20000, scoped, tag = 'input window, operand 1, single buffered']
    #allocation6 [shape = 's32[1]{0}', space=sflag, size = 0x4, scoped, tag = 'scoped memory for tpu_custom_call.1']
    #allocation7 [shape = 'u8[131072]{0}', space=vmem, size = 0x20000, scoped, tag = 'input window, operand 3, single buffered']
    #allocation8 [shape = 'u8[16384]{0}', space=vmem, size = 0x4000, scoped, tag = 'output window, operand 0, single buffered']
    %10 = vsyncpa [#allocation3], 0
    %11 = vsyncpa [#allocation6], 0
    %12 = vsyncpa [#allocation4], 0
    // Predicated region
    $region2: #{tpu_custom_call.1} parent=1 // pred_check
      _
    $region3: #{tpu_custom_call.1} parent=1 // pred_check_branch
      %14 = sbr.rel (0) target = $region5
    $region4: #{tpu_custom_call.1} parent=1 // pred_region
      %s16 = ssub.s32 512, 512
      %17 = vsyncadd [#allocation3], %s16
      %s18 = sshll.u32 [#allocation2], 4
      %s19 = int_to_ptr.vmem [resolvable:$true] %s18
      %24 = dma.hbm_to_vmem [thread:$0]  %s0, 512, %s19, [#allocation3], 256, 256, 16
    $region5: #{tpu_custom_call.1} parent=1 // pred_fallthru
      _
    // Predicated region
    $region6: #{tpu_custom_call.1} parent=1 // pred_check
      _
    $region7: #{tpu_custom_call.1} parent=1 // pred_check_branch
      %26 = sbr.rel (0) target = $region9
    $region8: #{tpu_custom_call.1} parent=1 // pred_region
      %s28 = ssub.s32 4096, 4096
      %29 = vsyncadd [#allocation6], %s28
      %s30 = sshll.u32 [#allocation5], 4
      %s31 = int_to_ptr.vmem [resolvable:$true] %s30
      %36 = dma.hbm_to_vmem [thread:$0]  %s1, 4096, %s31, [#allocation6], 128, 128, 8
    $region9: #{tpu_custom_call.1} parent=1 // pred_fallthru
      _
    // Predicated region
    $region10: #{tpu_custom_call.1} parent=1 // pred_check
      _
    $region11: #{tpu_custom_call.1} parent=1 // pred_check_branch
      %38 = sbr.rel (0) target = $region13
    $region12: #{tpu_custom_call.1} parent=1 // pred_region
      _
    $region13: #{tpu_custom_call.1} parent=1 // pred_fallthru
      _
    // Predicated region
    $region14: #{tpu_custom_call.1} parent=1 // pred_check
      _
    $region15: #{tpu_custom_call.1} parent=1 // pred_check_branch
      %40 = sbr.rel (0) target = $region17
    $region16: #{tpu_custom_call.1} parent=1 // pred_region
      %s42 = ssub.s32 4096, 4096
      %43 = vsyncadd [#allocation6], %s42
      %s44 = sshll.u32 [#allocation7], 4
      %s45 = int_to_ptr.vmem [resolvable:$true] %s44
      %50 = dma.hbm_to_vmem [thread:$0]  %s3, 4096, %s45, [#allocation6], 128, 128, 8
    $region17: #{tpu_custom_call.1} parent=1 // pred_fallthru
      _
    // Predicated region
    $region18: #{tpu_custom_call.1} parent=1 // pred_check
      _
    $region19: #{tpu_custom_call.1} parent=1 // pred_check_branch
      %52 = sbr.rel (0) target = $region21
    $region20: #{tpu_custom_call.1} parent=1 // pred_region
      _
    $region21: #{tpu_custom_call.1} parent=1 // pred_fallthru
      _
    // Predicated region
    $region22: #{tpu_custom_call.1} parent=1 // pred_check
      _
    $region23: #{tpu_custom_call.1} parent=1 // pred_check_branch
      %54 = sbr.rel (0) target = $region25
    $region24: #{tpu_custom_call.1} parent=1 // pred_region
      %55 = dma.done [#allocation3], 512
    $region25: #{tpu_custom_call.1} parent=1 // pred_fallthru
      _
    // Predicated region
    $region26: #{tpu_custom_call.1} parent=1 // pred_check
      _
    $region27: #{tpu_custom_call.1} parent=1 // pred_check_branch
      %57 = sbr.rel (0) target = $region29
    $region28: #{tpu_custom_call.1} parent=1 // pred_region
      %58 = dma.done [#allocation6], 4096
    $region29: #{tpu_custom_call.1} parent=1 // pred_fallthru
      _
    // Predicated region
    $region30: #{tpu_custom_call.1} parent=1 // pred_check
      _
    $region31: #{tpu_custom_call.1} parent=1 // pred_check_branch
      %60 = sbr.rel (0) target = $region33
    $region32: #{tpu_custom_call.1} parent=1 // pred_region
      %61 = dma.done [#allocation6], 4096
    $region33: #{tpu_custom_call.1} parent=1 // pred_fallthru
      _
    %v62 = vld [vmem:[#allocation2] sm:$0xff]
    %v63 = vld [vmem:[#allocation2 + $0x8] sm:$0xff]
    %v64 = vld [vmem:[#allocation2 + $0x10] sm:$0xff]
    %v65 = vld [vmem:[#allocation2 + $0x18] sm:$0xff]
    %v66 = vpack.c.bf16 %v64, %v62
    %v67 = vpack.c.bf16 %v65, %v63
    %v68 = vld [vmem:[#allocation5] sm:$0xff]
    %v69 = vld [vmem:[#allocation5 + $0x8] sm:$0xff]
    %v70 = vld [vmem:[#allocation5 + $0x10] sm:$0xff]
    %v71 = vld [vmem:[#allocation5 + $0x18] sm:$0xff]
    %v72 = vld [vmem:[#allocation5 + $0x20] sm:$0xff]
    %v73 = vld [vmem:[#allocation5 + $0x28] sm:$0xff]
    %v74 = vld [vmem:[#allocation5 + $0x30] sm:$0xff]
    %v75 = vld [vmem:[#allocation5 + $0x38] sm:$0xff]
    %v76 = vld [vmem:[#allocation5 + $0x40] sm:$0xff]
    %v77 = vld [vmem:[#allocation5 + $0x48] sm:$0xff]
    %v78 = vld [vmem:[#allocation5 + $0x50] sm:$0xff]
    %v79 = vld [vmem:[#allocation5 + $0x58] sm:$0xff]
    %v80 = vld [vmem:[#allocation5 + $0x60] sm:$0xff]
    %v81 = vld [vmem:[#allocation5 + $0x68] sm:$0xff]
    %v82 = vld [vmem:[#allocation5 + $0x70] sm:$0xff]
    %v83 = vld [vmem:[#allocation5 + $0x78] sm:$0xff]
    %v84 = vld [vmem:[#allocation5 + $0x80] sm:$0xff]
    %v85 = vld [vmem:[#allocation5 + $0x88] sm:$0xff]
    %v86 = vld [vmem:[#allocation5 + $0x90] sm:$0xff]
    %v87 = vld [vmem:[#allocation5 + $0x98] sm:$0xff]
    %v88 = vld [vmem:[#allocation5 + $0xa0] sm:$0xff]
    %v89 = vld [vmem:[#allocation5 + $0xa8] sm:$0xff]
    %v90 = vld [vmem:[#allocation5 + $0xb0] sm:$0xff]
    %v91 = vld [vmem:[#allocation5 + $0xb8] sm:$0xff]
    %v92 = vld [vmem:[#allocation5 + $0xc0] sm:$0xff]
    %v93 = vld [vmem:[#allocation5 + $0xc8] sm:$0xff]
    %v94 = vld [vmem:[#allocation5 + $0xd0] sm:$0xff]
    %v95 = vld [vmem:[#allocation5 + $0xd8] sm:$0xff]
    %v96 = vld [vmem:[#allocation5 + $0xe0] sm:$0xff]
    %v97 = vld [vmem:[#allocation5 + $0xe8] sm:$0xff]
    %v98 = vld [vmem:[#allocation5 + $0xf0] sm:$0xff]
    %v99 = vld [vmem:[#allocation5 + $0xf8] sm:$0xff]
    %v100 = vld [vmem:[%s2] sm:$0x3]
    %v102 = vlaneseq
    %v103 = vshrl.u32 %v102, 7
    %v104 = vsub.s32 0, %v103
    %v105 = vrot.slane %v100, %v104
    %v106 = vlaneseq
    %v107 = vshrl.u32 %v106, 7
    %v108 = vsub.s32 1, %v107
    %v109 = vrot.slane %v100, %v108
    %v144 = vunpack.c.l.b16 %v68
    %v145 = vunpack.c.h.b16 %v68
    %v146 = vunpack.c.l.b16 %v69
    %v147 = vunpack.c.h.b16 %v69
    %v148 = vunpack.c.l.b16 %v70
    %v149 = vunpack.c.h.b16 %v70
    %v150 = vunpack.c.l.b16 %v71
    %v151 = vunpack.c.h.b16 %v71
    %v152 = vunpack.c.l.b16 %v72
    %v153 = vunpack.c.h.b16 %v72
    %v154 = vunpack.c.l.b16 %v73
    %v155 = vunpack.c.h.b16 %v73
    %v156 = vunpack.c.l.b16 %v74
    %v157 = vunpack.c.h.b16 %v74
    %v158 = vunpack.c.l.b16 %v75
    %v159 = vunpack.c.h.b16 %v75
    %v160 = vunpack.c.l.b16 %v76
    %v161 = vunpack.c.h.b16 %v76
    %v162 = vunpack.c.l.b16 %v77
    %v163 = vunpack.c.h.b16 %v77
    %v164 = vunpack.c.l.b16 %v78
    %v165 = vunpack.c.h.b16 %v78
    %v166 = vunpack.c.l.b16 %v79
    %v167 = vunpack.c.h.b16 %v79
    %v168 = vunpack.c.l.b16 %v80
    %v169 = vunpack.c.h.b16 %v80
    %v170 = vunpack.c.l.b16 %v81
    %v171 = vunpack.c.h.b16 %v81
    %v172 = vunpack.c.l.b16 %v82
    %v173 = vunpack.c.h.b16 %v82
    %v174 = vunpack.c.l.b16 %v83
    %v175 = vunpack.c.h.b16 %v83
    %v176 = vunpack.c.l.b16 %v84
    %v177 = vunpack.c.h.b16 %v84
    %v178 = vunpack.c.l.b16 %v85
    %v179 = vunpack.c.h.b16 %v85
    %v180 = vunpack.c.l.b16 %v86
    %v181 = vunpack.c.h.b16 %v86
    %v182 = vunpack.c.l.b16 %v87
    %v183 = vunpack.c.h.b16 %v87
    %v184 = vunpack.c.l.b16 %v88
    %v185 = vunpack.c.h.b16 %v88
    %v186 = vunpack.c.l.b16 %v89
    %v187 = vunpack.c.h.b16 %v89
    %v188 = vunpack.c.l.b16 %v90
    %v189 = vunpack.c.h.b16 %v90
    %v190 = vunpack.c.l.b16 %v91
    %v191 = vunpack.c.h.b16 %v91
    %v192 = vunpack.c.l.b16 %v92
    %v193 = vunpack.c.h.b16 %v92
    %v194 = vunpack.c.l.b16 %v93
    %v195 = vunpack.c.h.b16 %v93
    %v196 = vunpack.c.l.b16 %v94
    %v197 = vunpack.c.h.b16 %v94
    %v198 = vunpack.c.l.b16 %v95
    %v199 = vunpack.c.h.b16 %v95
    %v200 = vunpack.c.l.b16 %v96
    %v201 = vunpack.c.h.b16 %v96
    %v202 = vunpack.c.l.b16 %v97
    %v203 = vunpack.c.h.b16 %v97
    %v204 = vunpack.c.l.b16 %v98
    %v205 = vunpack.c.h.b16 %v98
    %v206 = vunpack.c.l.b16 %v99
    %v207 = vunpack.c.h.b16 %v99
    %v208 = vpack.c.b16 %v146, %v144
    %v209 = vpack.c.b16 %v147, %v145
    %v210 = vpack.c.b16 %v150, %v148
    %v211 = vpack.c.b16 %v151, %v149
    %v212 = vpack.c.b16 %v154, %v152
    %v213 = vpack.c.b16 %v155, %v153
    %v214 = vpack.c.b16 %v158, %v156
    %v215 = vpack.c.b16 %v159, %v157
    %v216 = vpack.c.b16 %v162, %v160
    %v217 = vpack.c.b16 %v163, %v161
    %v218 = vpack.c.b16 %v166, %v164
    %v219 = vpack.c.b16 %v167, %v165
    %v220 = vpack.c.b16 %v170, %v168
    %v221 = vpack.c.b16 %v171, %v169
    %v222 = vpack.c.b16 %v174, %v172
    %v223 = vpack.c.b16 %v175, %v173
    %v224 = vpack.c.b16 %v178, %v176
    %v225 = vpack.c.b16 %v179, %v177
    %v226 = vpack.c.b16 %v182, %v180
    %v227 = vpack.c.b16 %v183, %v181
    %v228 = vpack.c.b16 %v186, %v184
    %v229 = vpack.c.b16 %v187, %v185
    %v230 = vpack.c.b16 %v190, %v188
    %v231 = vpack.c.b16 %v191, %v189
    %v232 = vpack.c.b16 %v194, %v192
    %v233 = vpack.c.b16 %v195, %v193
    %v234 = vpack.c.b16 %v198, %v196
    %v235 = vpack.c.b16 %v199, %v197
    %v236 = vpack.c.b16 %v202, %v200
    %v237 = vpack.c.b16 %v203, %v201
    %v238 = vpack.c.b16 %v206, %v204
    %v239 = vpack.c.b16 %v207, %v205
    %272 = vmatprep.subr.bf16.mxu0 %v209
    %273 = vmatpush1.bf16.msra.mxu0 %v208
    %274 = vmatprep.subr.bf16.mxu0 %v211
    %275 = vmatpush1.bf16.msra.mxu0 %v210
    %276 = vmatprep.subr.bf16.mxu0 %v213
    %277 = vmatpush1.bf16.msra.mxu0 %v212
    %278 = vmatprep.subr.bf16.mxu0 %v215
    %279 = vmatpush1.bf16.msra.mxu0 %v214
    %280 = vmatprep.subr.bf16.mxu0 %v217
    %281 = vmatpush1.bf16.msra.mxu0 %v216
    %282 = vmatprep.subr.bf16.mxu0 %v219
    %283 = vmatpush1.bf16.msra.mxu0 %v218
    %284 = vmatprep.subr.bf16.mxu0 %v221
    %285 = vmatpush1.bf16.msra.mxu0 %v220
    %286 = vmatprep.subr.bf16.mxu0 %v223
    %287 = vmatpush1.bf16.msra.mxu0 %v222
    %288 = vmatprep.subr.bf16.mxu0 %v225
    %289 = vmatpush1.bf16.msra.mxu0 %v224
    %290 = vmatprep.subr.bf16.mxu0 %v227
    %291 = vmatpush1.bf16.msra.mxu0 %v226
    %292 = vmatprep.subr.bf16.mxu0 %v229
    %293 = vmatpush1.bf16.msra.mxu0 %v228
    %294 = vmatprep.subr.bf16.mxu0 %v231
    %295 = vmatpush1.bf16.msra.mxu0 %v230
    %296 = vmatprep.subr.bf16.mxu0 %v233
    %297 = vmatpush1.bf16.msra.mxu0 %v232
    %298 = vmatprep.subr.bf16.mxu0 %v235
    %299 = vmatpush1.bf16.msra.mxu0 %v234
    %300 = vmatprep.subr.bf16.mxu0 %v237
    %301 = vmatpush1.bf16.msra.mxu0 %v236
    %302 = vmatprep.subr.bf16.mxu0 %v239
    %303 = vmatpush1.bf16.msra.mxu0 %v238
    %304 = vmatprep.mubr.bf16.mxu0 %v67
    %305 = vmatmul.mubr.bf16.gmra.mrb[0].mxu0 %v66
    %v306 = vpop.f32.mrb[0].mxu0
    %v307 = vadd.f32 %v105, %v306
    %v308 = vpop.f32.mrb[0].mxu0
    %v309 = vadd.f32 %v109, %v308
    %v310 = vpop.f32.mrb[0].mxu0
    %v311 = vadd.f32 %v105, %v310
    %v312 = vpop.f32.mrb[0].mxu0
    %v313 = vadd.f32 %v109, %v312
    %314 = vdwg.mxu0
    %v315 = vmax.f32 %v307, 0.0
    %v316 = vmax.f32 %v309, 0.0
    %v317 = vmax.f32 %v311, 0.0
    %v318 = vmax.f32 %v313, 0.0
    %v319 = vpack.c.bf16 %v317, %v315
    %v320 = vpack.c.bf16 %v318, %v316
    %v321 = vld [vmem:[#allocation7] sm:$0xff]
    %v322 = vld [vmem:[#allocation7 + $0x8] sm:$0xff]
    %v323 = vld [vmem:[#allocation7 + $0x10] sm:$0xff]
    %v324 = vld [vmem:[#allocation7 + $0x18] sm:$0xff]
    %v325 = vld [vmem:[#allocation7 + $0x20] sm:$0xff]
    %v326 = vld [vmem:[#allocation7 + $0x28] sm:$0xff]
    %v327 = vld [vmem:[#allocation7 + $0x30] sm:$0xff]
    %v328 = vld [vmem:[#allocation7 + $0x38] sm:$0xff]
    %v329 = vld [vmem:[#allocation7 + $0x40] sm:$0xff]
    %v330 = vld [vmem:[#allocation7 + $0x48] sm:$0xff]
    %v331 = vld [vmem:[#allocation7 + $0x50] sm:$0xff]
    %v332 = vld [vmem:[#allocation7 + $0x58] sm:$0xff]
    %v333 = vld [vmem:[#allocation7 + $0x60] sm:$0xff]
    %v334 = vld [vmem:[#allocation7 + $0x68] sm:$0xff]
    %v335 = vld [vmem:[#allocation7 + $0x70] sm:$0xff]
    %v336 = vld [vmem:[#allocation7 + $0x78] sm:$0xff]
    %v337 = vld [vmem:[#allocation7 + $0x80] sm:$0xff]
    %v338 = vld [vmem:[#allocation7 + $0x88] sm:$0xff]
    %v339 = vld [vmem:[#allocation7 + $0x90] sm:$0xff]
    %v340 = vld [vmem:[#allocation7 + $0x98] sm:$0xff]
    %v341 = vld [vmem:[#allocation7 + $0xa0] sm:$0xff]
    %v342 = vld [vmem:[#allocation7 + $0xa8] sm:$0xff]
    %v343 = vld [vmem:[#allocation7 + $0xb0] sm:$0xff]
    %v344 = vld [vmem:[#allocation7 + $0xb8] sm:$0xff]
    %v345 = vld [vmem:[#allocation7 + $0xc0] sm:$0xff]
    %v346 = vld [vmem:[#allocation7 + $0xc8] sm:$0xff]
    %v347 = vld [vmem:[#allocation7 + $0xd0] sm:$0xff]
    %v348 = vld [vmem:[#allocation7 + $0xd8] sm:$0xff]
    %v349 = vld [vmem:[#allocation7 + $0xe0] sm:$0xff]
    %v350 = vld [vmem:[#allocation7 + $0xe8] sm:$0xff]
    %v351 = vld [vmem:[#allocation7 + $0xf0] sm:$0xff]
    %v352 = vld [vmem:[#allocation7 + $0xf8] sm:$0xff]
    %v353 = vld [vmem:[%s4] sm:$0x3]
    %v355 = vlaneseq
    %v356 = vshrl.u32 %v355, 7
    %v357 = vsub.s32 0, %v356
    %v358 = vrot.slane %v353, %v357
    %v359 = vlaneseq
    %v360 = vshrl.u32 %v359, 7
    %v361 = vsub.s32 1, %v360
    %v362 = vrot.slane %v353, %v361
    %v397 = vunpack.c.l.b16 %v321
    %v398 = vunpack.c.h.b16 %v321
    %v399 = vunpack.c.l.b16 %v322
    %v400 = vunpack.c.h.b16 %v322
    %v401 = vunpack.c.l.b16 %v323
    %v402 = vunpack.c.h.b16 %v323
    %v403 = vunpack.c.l.b16 %v324
    %v404 = vunpack.c.h.b16 %v324
    %v405 = vunpack.c.l.b16 %v325
    %v406 = vunpack.c.h.b16 %v325
    %v407 = vunpack.c.l.b16 %v326
    %v408 = vunpack.c.h.b16 %v326
    %v409 = vunpack.c.l.b16 %v327
    %v410 = vunpack.c.h.b16 %v327
    %v411 = vunpack.c.l.b16 %v328
    %v412 = vunpack.c.h.b16 %v328
    %v413 = vunpack.c.l.b16 %v329
    %v414 = vunpack.c.h.b16 %v329
    %v415 = vunpack.c.l.b16 %v330
    %v416 = vunpack.c.h.b16 %v330
    %v417 = vunpack.c.l.b16 %v331
    %v418 = vunpack.c.h.b16 %v331
    %v419 = vunpack.c.l.b16 %v332
    %v420 = vunpack.c.h.b16 %v332
    %v421 = vunpack.c.l.b16 %v333
    %v422 = vunpack.c.h.b16 %v333
    %v423 = vunpack.c.l.b16 %v334
    %v424 = vunpack.c.h.b16 %v334
    %v425 = vunpack.c.l.b16 %v335
    %v426 = vunpack.c.h.b16 %v335
    %v427 = vunpack.c.l.b16 %v336
    %v428 = vunpack.c.h.b16 %v336
    %v429 = vunpack.c.l.b16 %v337
    %v430 = vunpack.c.h.b16 %v337
    %v431 = vunpack.c.l.b16 %v338
    %v432 = vunpack.c.h.b16 %v338
    %v433 = vunpack.c.l.b16 %v339
    %v434 = vunpack.c.h.b16 %v339
    %v435 = vunpack.c.l.b16 %v340
    %v436 = vunpack.c.h.b16 %v340
    %v437 = vunpack.c.l.b16 %v341
    %v438 = vunpack.c.h.b16 %v341
    %v439 = vunpack.c.l.b16 %v342
    %v440 = vunpack.c.h.b16 %v342
    %v441 = vunpack.c.l.b16 %v343
    %v442 = vunpack.c.h.b16 %v343
    %v443 = vunpack.c.l.b16 %v344
    %v444 = vunpack.c.h.b16 %v344
    %v445 = vunpack.c.l.b16 %v345
    %v446 = vunpack.c.h.b16 %v345
    %v447 = vunpack.c.l.b16 %v346
    %v448 = vunpack.c.h.b16 %v346
    %v449 = vunpack.c.l.b16 %v347
    %v450 = vunpack.c.h.b16 %v347
    %v451 = vunpack.c.l.b16 %v348
    %v452 = vunpack.c.h.b16 %v348
    %v453 = vunpack.c.l.b16 %v349
    %v454 = vunpack.c.h.b16 %v349
    %v455 = vunpack.c.l.b16 %v350
    %v456 = vunpack.c.h.b16 %v350
    %v457 = vunpack.c.l.b16 %v351
    %v458 = vunpack.c.h.b16 %v351
    %v459 = vunpack.c.l.b16 %v352
    %v460 = vunpack.c.h.b16 %v352
    %v461 = vpack.c.b16 %v399, %v397
    %v462 = vpack.c.b16 %v400, %v398
    %v463 = vpack.c.b16 %v403, %v401
    %v464 = vpack.c.b16 %v404, %v402
    %v465 = vpack.c.b16 %v407, %v405
    %v466 = vpack.c.b16 %v408, %v406
    %v467 = vpack.c.b16 %v411, %v409
    %v468 = vpack.c.b16 %v412, %v410
    %v469 = vpack.c.b16 %v415, %v413
    %v470 = vpack.c.b16 %v416, %v414
    %v471 = vpack.c.b16 %v419, %v417
    %v472 = vpack.c.b16 %v420, %v418
    %v473 = vpack.c.b16 %v423, %v421
    %v474 = vpack.c.b16 %v424, %v422
    %v475 = vpack.c.b16 %v427, %v425
    %v476 = vpack.c.b16 %v428, %v426
    %v477 = vpack.c.b16 %v431, %v429
    %v478 = vpack.c.b16 %v432, %v430
    %v479 = vpack.c.b16 %v435, %v433
    %v480 = vpack.c.b16 %v436, %v434
    %v481 = vpack.c.b16 %v439, %v437
    %v482 = vpack.c.b16 %v440, %v438
    %v483 = vpack.c.b16 %v443, %v441
    %v484 = vpack.c.b16 %v444, %v442
    %v485 = vpack.c.b16 %v447, %v445
    %v486 = vpack.c.b16 %v448, %v446
    %v487 = vpack.c.b16 %v451, %v449
    %v488 = vpack.c.b16 %v452, %v450
    %v489 = vpack.c.b16 %v455, %v453
    %v490 = vpack.c.b16 %v456, %v454
    %v491 = vpack.c.b16 %v459, %v457
    %v492 = vpack.c.b16 %v460, %v458
    %525 = vmatprep.subr.bf16.mxu0 %v462
    %526 = vmatpush1.bf16.msra.mxu0 %v461
    %527 = vmatprep.subr.bf16.mxu0 %v464
    %528 = vmatpush1.bf16.msra.mxu0 %v463
    %529 = vmatprep.subr.bf16.mxu0 %v466
    %530 = vmatpush1.bf16.msra.mxu0 %v465
    %531 = vmatprep.subr.bf16.mxu0 %v468
    %532 = vmatpush1.bf16.msra.mxu0 %v467
    %533 = vmatprep.subr.bf16.mxu0 %v470
    %534 = vmatpush1.bf16.msra.mxu0 %v469
    %535 = vmatprep.subr.bf16.mxu0 %v472
    %536 = vmatpush1.bf16.msra.mxu0 %v471
    %537 = vmatprep.subr.bf16.mxu0 %v474
    %538 = vmatpush1.bf16.msra.mxu0 %v473
    %539 = vmatprep.subr.bf16.mxu0 %v476
    %540 = vmatpush1.bf16.msra.mxu0 %v475
    %541 = vmatprep.subr.bf16.mxu0 %v478
    %542 = vmatpush1.bf16.msra.mxu0 %v477
    %543 = vmatprep.subr.bf16.mxu0 %v480
    %544 = vmatpush1.bf16.msra.mxu0 %v479
    %545 = vmatprep.subr.bf16.mxu0 %v482
    %546 = vmatpush1.bf16.msra.mxu0 %v481
    %547 = vmatprep.subr.bf16.mxu0 %v484
    %548 = vmatpush1.bf16.msra.mxu0 %v483
    %549 = vmatprep.subr.bf16.mxu0 %v486
    %550 = vmatpush1.bf16.msra.mxu0 %v485
    %551 = vmatprep.subr.bf16.mxu0 %v488
    %552 = vmatpush1.bf16.msra.mxu0 %v487
    %553 = vmatprep.subr.bf16.mxu0 %v490
    %554 = vmatpush1.bf16.msra.mxu0 %v489
    %555 = vmatprep.subr.bf16.mxu0 %v492
    %556 = vmatpush1.bf16.msra.mxu0 %v491
    %557 = vmatprep.mubr.bf16.mxu0 %v320
    %558 = vmatmul.mubr.bf16.gmra.mrb[0].mxu0 %v319
    %v559 = vpop.f32.mrb[0].mxu0
    %v560 = vadd.f32 %v358, %v559
    %v561 = vpop.f32.mrb[0].mxu0
    %v562 = vadd.f32 %v362, %v561
    %v563 = vpop.f32.mrb[0].mxu0
    %v564 = vadd.f32 %v358, %v563
    %v565 = vpop.f32.mrb[0].mxu0
    %v566 = vadd.f32 %v362, %v565
    %567 = vdwg.mxu0
    %568 = vst [vmem:[#allocation8] sm:$0xff] %v560
    %569 = vst [vmem:[#allocation8 + $0x8] sm:$0xff] %v562
    %570 = vst [vmem:[#allocation8 + $0x10] sm:$0xff] %v564
    %571 = vst [vmem:[#allocation8 + $0x18] sm:$0xff] %v566
    // Predicated region
    $region34: #{tpu_custom_call.1} parent=1 // pred_check
      _
    $region35: #{tpu_custom_call.1} parent=1 // pred_check_branch
      %573 = sbr.rel (0) target = $region37
    $region36: #{tpu_custom_call.1} parent=1 // pred_region
      %s575 = ssub.s32 512, 512
      %576 = vsyncadd [#allocation4], %s575
      %s577 = sshll.u32 [#allocation8], 4
      %s578 = int_to_ptr.vmem [resolvable:$true] %s577
      %583 = dma.vmem_to_hbm [thread:$0]  %s578, 512, %s5, [#allocation4], 256, 256, 16
    $region37: #{tpu_custom_call.1} parent=1 // pred_fallthru
      _
    // Predicated region
    $region38: #{tpu_custom_call.1} parent=1 // pred_check
      _
    $region39: #{tpu_custom_call.1} parent=1 // pred_check_branch
      %585 = sbr.rel (0) target = $region41
    $region40: #{tpu_custom_call.1} parent=1 // pred_region
      %586 = dma.done [#allocation4], 512
    $region41: #{tpu_custom_call.1} parent=1 // pred_fallthru
      _
    %587 = vsyncpa [#allocation3], 1
    %588 = vsyncpa [#allocation6], 1
    %589 = vsyncpa [#allocation4], 1

</llo_original>
